<compile_context>
chip_gen: v6e
topology: v6e:2x2x1
jax: 0.10.0
libtpu: 0.0.40
codegen_flags: <defaults>
</compile_context>

<pallas_src>
import math

import jax
import jax.numpy as jnp
from jax.experimental import pallas as pl
from jax.experimental.pallas import tpu as pltpu


def _truncation_kernel(x_ref, coeff_ref, bias_ref, o_ref):
    # Pure FMA-style elementwise work; the layer mask + lerp are already folded
    # into coeff/bias by the wrapper.
    o_ref[...] = x_ref[...] * coeff_ref[...] + bias_ref[...]


def truncation(x, avg_latent, *, max_layer=8, threshold=0.7,
               target_tile_bytes=2 * 1024 * 1024):
    """x: (B, L, D); avg_latent: (L, D). Returns (B, L, D)."""
    assert x.ndim == 3
    B, L, D = x.shape
    assert avg_latent.shape == (L, D)
    dtype = x.dtype
    t = jnp.asarray(threshold, dtype=dtype)
    one = jnp.asarray(1.0, dtype=dtype)

    # Per-layer affine coefficients (tiny, computed once in the wrapper).
    layer_mask = jnp.arange(L) < max_layer
    coeff_l = jnp.where(layer_mask, t, one).astype(dtype)                       # (L,)
    bias_l = jnp.where(layer_mask[:, None],
                       (one - t) * avg_latent.astype(dtype),
                       jnp.zeros_like(avg_latent, dtype=dtype)).astype(dtype)   # (L, D)

    # Flatten to lane-dense rows.
    rows = B * L
    x2 = x.reshape(rows, D)

    # Row-tile size: multiple of lcm(L, 8), ~target_tile_bytes per x tile.
    unit = (L * 8) // math.gcd(L, 8)
    bytes_per_row = D * x2.dtype.itemsize
    target_rows = max(1, target_tile_bytes // max(bytes_per_row, 1))
    tile_r = max(unit, (target_rows // unit) * unit)
    if tile_r >= rows:
        tile_r = rows  # single block covering the whole flattened array

    # tile_r is always a multiple of L (either a multiple of lcm(L, 8) or B*L),
    # so one pre-tiled coeff/bias block covers every grid step.
    reps = tile_r // L
    coeff_t = jnp.tile(coeff_l, reps)[:, None]   # (tile_r, 1)
    bias_t = jnp.tile(bias_l, (reps, 1))         # (tile_r, D)

    grid = (pl.cdiv(rows, tile_r),)

    out2 = pl.pallas_call(
        _truncation_kernel,
        out_shape=jax.ShapeDtypeStruct((rows, D), dtype),
        grid=grid,
        in_specs=[
            pl.BlockSpec((tile_r, D), lambda i: (i, 0)),   # x rows (streamed)
            pl.BlockSpec((tile_r, 1), lambda i: (0, 0)),   # coeff  (resident)
            pl.BlockSpec((tile_r, D), lambda i: (0, 0)),   # bias   (resident)
        ],
        out_specs=pl.BlockSpec((tile_r, D), lambda i: (i, 0)),
        compiler_params=pltpu.CompilerParams(
            dimension_semantics=("parallel",),
        ),
    )(x2, coeff_t, bias_t)

    return out2.reshape(B, L, D)


def _reference(x, avg_latent, max_layer, threshold):
    interp = avg_latent[None] + threshold * (x - avg_latent[None])
    do_trunc = (jnp.arange(x.shape[1]) < max_layer)[None, :, None]
    return jnp.where(do_trunc, interp, x)


if __name__ == "__main__":
    key = jax.random.PRNGKey(0)
    k_x, k_avg = jax.random.split(key)

    B, L, D = 2, 12, 128          # batch, style layers, latent dim
    max_layer, threshold = 8, 0.7

    x = jax.random.normal(k_x, (B, L, D), dtype=jnp.float32)
    avg_latent = jax.random.normal(k_avg, (L, D), dtype=jnp.float32)

    out = truncation(x, avg_latent, max_layer=max_layer, threshold=threshold)
    out = jax.block_until_ready(out)

    ref = _reference(x, avg_latent, max_layer, threshold)
    assert out.shape == (B, L, D)
    # coeff*x + bias is an algebraic refactor of avg + t*(x - avg); tolerance
    # covers the couple-of-ULP reassociation difference.
    assert jnp.allclose(out, ref, atol=1e-5, rtol=1e-5)

    print("KERNEL_OK")
</pallas_src>

<mosaic_0001>
module attributes {stable_mosaic.version = 11 : i64} {
  func.func @_truncation_kernel(%arg0: i32, %arg1: memref<24x128xf32, #tpu.memory_space<vmem>>, %arg2: memref<24x1xf32, #tpu.memory_space<vmem>>, %arg3: memref<24x128xf32, #tpu.memory_space<vmem>>, %arg4: memref<24x128xf32, #tpu.memory_space<vmem>>) attributes {dimension_semantics = [#tpu.dimension_semantics<parallel>], iteration_bounds = array<i64: 1>, scalar_prefetch = 0 : i64, scratch_operands = 0 : i64, tpu.core_type = #tpu.core_type<tc>, window_params = [{transform_indices = @transform_0, window_bounds = array<i64: 24, 128>}, {pipeline_mode = #tpu.pipeline_mode<synchronous>, transform_indices = @transform_1, window_bounds = array<i64: 24, 1>}, {pipeline_mode = #tpu.pipeline_mode<synchronous>, transform_indices = @transform_2, window_bounds = array<i64: 24, 128>}, {transform_indices = @transform_3, window_bounds = array<i64: 24, 128>}]} {
    %c0 = arith.constant 0 : index
    %c0_0 = arith.constant 0 : index
    %0 = vector.load %arg1[%c0, %c0_0] : memref<24x128xf32, #tpu.memory_space<vmem>>, vector<24x128xf32>
    %c0_1 = arith.constant 0 : index
    %c0_2 = arith.constant 0 : index
    %1 = vector.load %arg2[%c0_1, %c0_2] : memref<24x1xf32, #tpu.memory_space<vmem>>, vector<24x1xf32>
    %2 = vector.broadcast %1 : vector<24x1xf32> to vector<24x128xf32>
    %3 = arith.mulf %0, %2 : vector<24x128xf32>
    %c0_3 = arith.constant 0 : index
    %c0_4 = arith.constant 0 : index
    %4 = vector.load %arg3[%c0_3, %c0_4] : memref<24x128xf32, #tpu.memory_space<vmem>>, vector<24x128xf32>
    %5 = arith.addf %3, %4 : vector<24x128xf32>
    %c0_5 = arith.constant 0 : index
    %c0_6 = arith.constant 0 : index
    %6 = vector.load %arg4[%c0_5, %c0_6] : memref<24x128xf32, #tpu.memory_space<vmem>>, vector<24x128xf32>
    tpu.vector_store %arg4[%c0_5, %c0_6], %5 {strides = array<i32>} : memref<24x128xf32, #tpu.memory_space<vmem>>, vector<24x128xf32>,
    return
  }
  func.func @transform_0(%arg0: i32) -> (i32, i32) {
    %c0_i32 = arith.constant 0 : i32
    %c0_i32_0 = arith.constant 0 : i32
    return %arg0, %c0_i32 : i32, i32
  }
  func.func @transform_1(%arg0: i32) -> (i32, i32) {
    %c0_i32 = arith.constant 0 : i32
    %c0_i32_0 = arith.constant 0 : i32
    %c0_i32_1 = arith.constant 0 : i32
    return %c0_i32, %c0_i32_0 : i32, i32
  }
  func.func @transform_2(%arg0: i32) -> (i32, i32) {
    %c0_i32 = arith.constant 0 : i32
    %c0_i32_0 = arith.constant 0 : i32
    %c0_i32_1 = arith.constant 0 : i32
    return %c0_i32, %c0_i32_0 : i32, i32
  }
  func.func @transform_3(%arg0: i32) -> (i32, i32) {
    %c0_i32 = arith.constant 0 : i32
    %c0_i32_0 = arith.constant 0 : i32
    return %arg0, %c0_i32 : i32, i32
  }
}

</mosaic_0001>

<llo_original>
// kernel: tpu_custom_call.1
$region0: #{tpu_custom_call.1}
  #allocation0 [shape = 'u32[]', space=smem, size = 0x4, offset = 0x4, fixed_abs, tag = 'smem constant byte address 0x4 - core index']
  #allocation1 [shape = 'u32[144,128]{1,0:T(1,128)}', space=vmem, size = 0x12000, scoped, tag = 'internal scratch']
  %s0 = inlined_call_operand.vmem [shape: f32[24,128], index: 0, kind: input, shape index: {}]
  %s1 = inlined_call_operand.vmem [shape: f32[24,1], index: 1, kind: input, shape index: {}]
  %s2 = inlined_call_operand.hbm [shape: f32[24,128], index: 2, kind: input, shape index: {}]
  %s3 = inlined_call_operand.hbm [shape: f32[24,128], index: 3, kind: output, shape index: {}]
  %s4 = sld [smem:[#allocation0]]
  $region26: #{tpu_custom_call.1} parent=0
    _
  %s6 = ssub.s32 1, %s4
  %s7 = scalar_select 0, %s6, %s4
  $region1: #{tpu_custom_call.1} parent=0
    #allocation2 [shape = 'u8[12288]{0}', space=vmem, size = 0x3000, scoped, tag = 'input window, operand 2, single buffered']
    #allocation3 [shape = 's32[1]{0}', space=sflag, size = 0x4, scoped, tag = 'scoped memory for tpu_custom_call.1']
    #allocation4 [shape = 's32[1]{0}', space=sflag, size = 0x4, scoped, tag = 'scoped memory for tpu_custom_call.1']
    #allocation5 [shape = 'u8[12288]{0}', space=vmem, size = 0x3000, scoped, tag = 'output window, operand 0, single buffered']
    %8 = vsyncpa [#allocation3], 0
    %9 = vsyncpa [#allocation4], 0
    // Predicated region
    $region2: #{tpu_custom_call.1} parent=1 // pred_check
      _
    $region3: #{tpu_custom_call.1} parent=1 // pred_check_branch
      %11 = sbr.rel (0) target = $region5
    $region4: #{tpu_custom_call.1} parent=1 // pred_region
      _
    $region5: #{tpu_custom_call.1} parent=1 // pred_fallthru
      _
    // Predicated region
    $region6: #{tpu_custom_call.1} parent=1 // pred_check
      _
    $region7: #{tpu_custom_call.1} parent=1 // pred_check_branch
      %13 = sbr.rel (0) target = $region9
    $region8: #{tpu_custom_call.1} parent=1 // pred_region
      _
    $region9: #{tpu_custom_call.1} parent=1 // pred_fallthru
      _
    // Predicated region
    $region10: #{tpu_custom_call.1} parent=1 // pred_check
      _
    $region11: #{tpu_custom_call.1} parent=1 // pred_check_branch
      %15 = sbr.rel (0) target = $region13
    $region12: #{tpu_custom_call.1} parent=1 // pred_region
      %s17 = ssub.s32 384, 384
      %18 = vsyncadd [#allocation3], %s17
      %s19 = sshll.u32 [#allocation2], 4
      %s20 = int_to_ptr.vmem [resolvable:$true] %s19
      %25 = dma.hbm_to_vmem [thread:$0]  %s2, 384, %s20, [#allocation3], 128, 128, 8
    $region13: #{tpu_custom_call.1} parent=1 // pred_fallthru
      _
    // Predicated region
    $region14: #{tpu_custom_call.1} parent=1 // pred_check
      _
    $region15: #{tpu_custom_call.1} parent=1 // pred_check_branch
      %27 = sbr.rel (0) target = $region17
    $region16: #{tpu_custom_call.1} parent=1 // pred_region
      %28 = dma.done [#allocation3], 384
    $region17: #{tpu_custom_call.1} parent=1 // pred_fallthru
      _
    %v29 = vld [vmem:[%s0] sm:$0xff]
    %v30 = vld [vmem:[%s0 + $0x8] sm:$0xff]
    %v31 = vld [vmem:[%s0 + $0x10] sm:$0xff]
    %v32 = vld [vmem:[%s1] sm:$0xff]
    %v33 = vld [vmem:[%s1 + $0x8] sm:$0xff]
    %v34 = vld [vmem:[%s1 + $0x10] sm:$0xff]
    %36 = vset.pattern.permute.xlu0 0
    %37 = vperm.xlu0 %36, %v32
    %v38 = vpop.permute.xlu0 %37
    %41 = vset.pattern.permute.xlu0 0
    %42 = vperm.xlu0 %41, %v33
    %v43 = vpop.permute.xlu0 %42
    %46 = vset.pattern.permute.xlu0 0
    %47 = vperm.xlu0 %46, %v34
    %v48 = vpop.permute.xlu0 %47
    %v50 = vmul.f32 %v29, %v38
    %v51 = vmul.f32 %v30, %v43
    %v52 = vmul.f32 %v31, %v48
    %v53 = vld [vmem:[#allocation2] sm:$0xff]
    %v54 = vld [vmem:[#allocation2 + $0x8] sm:$0xff]
    %v55 = vld [vmem:[#allocation2 + $0x10] sm:$0xff]
    %v56 = vadd.f32 %v50, %v53
    %v57 = vadd.f32 %v51, %v54
    %v58 = vadd.f32 %v52, %v55
    %59 = vst [vmem:[#allocation5] sm:$0xff] %v56
    %60 = vst [vmem:[#allocation5 + $0x8] sm:$0xff] %v57
    %61 = vst [vmem:[#allocation5 + $0x10] sm:$0xff] %v58
    // Predicated region
    $region18: #{tpu_custom_call.1} parent=1 // pred_check
      _
    $region19: #{tpu_custom_call.1} parent=1 // pred_check_branch
      %63 = sbr.rel (0) target = $region21
    $region20: #{tpu_custom_call.1} parent=1 // pred_region
      %s65 = ssub.s32 384, 384
      %66 = vsyncadd [#allocation4], %s65
      %s67 = sshll.u32 [#allocation5], 4
      %s68 = int_to_ptr.vmem [resolvable:$true] %s67
      %73 = dma.vmem_to_hbm [thread:$0]  %s68, 384, %s3, [#allocation4], 128, 128, 8
    $region21: #{tpu_custom_call.1} parent=1 // pred_fallthru
      _
    // Predicated region
    $region22: #{tpu_custom_call.1} parent=1 // pred_check
      _
    $region23: #{tpu_custom_call.1} parent=1 // pred_check_branch
      %75 = sbr.rel (0) target = $region25
    $region24: #{tpu_custom_call.1} parent=1 // pred_region
      %76 = dma.done [#allocation4], 384
    $region25: #{tpu_custom_call.1} parent=1 // pred_fallthru
      _
    %77 = vsyncpa [#allocation3], 1
    %78 = vsyncpa [#allocation4], 1

</llo_original>
